<compile_context>
chip_gen: v7x
topology: tpu7x:2x2x1
jax: 0.10.0
libtpu: 0.0.40
codegen_flags: <defaults>
</compile_context>

<pallas_src>
import functools

import jax
import jax.numpy as jnp
from jax import lax
from jax.experimental import pallas as pl
from jax.experimental.pallas import tpu as pltpu


def _round_up(x, m):
    return (x + m - 1) // m * m


def _default_vmem_limit():
    # Generation-aware scoped-VMEM limit: ~0.8x physical (v5e/v6e: 128 MiB,
    # v7x: 64 MiB), with a v7x-safe fallback.
    try:
        cap = int(pltpu.get_tpu_info().vmem_capacity_bytes)
        return int(min(max(cap * 4 // 5, 32 << 20), 112 << 20))
    except Exception:  # older jaxlib / interpret mode
        return 48 << 20


def _clip_tile_n(n, d, mxu_itemsize, vmem_limit):
    """Row-tile for the contrastive kernel, sized from the real working set."""
    n8 = _round_up(n, 8)
    if n8 <= 256:
        return n8  # single (tiny) block, padded to a sublane multiple
    n128 = _round_up(n, 128)
    resident = 2 * d * n128 * mxu_itemsize              # pre-cast (D, N) residents
    per_row = 6 * n128 * 4 + 4 * d * 4                  # 2 logit tiles + exp temps + row blocks
    budget = max(int(vmem_limit * 0.75) - resident, 4 << 20)
    max_rows = budget // per_row
    for cand in (512, 256, 128):                        # MXU-aligned candidates
        if cand <= max_rows and cand <= n8:
            return cand
    return 128


def _caption_tile_rows(nt, v, vmem_limit):
    """Token-row tile for the caption CE kernel (2 buffers + ~4 temporaries)."""
    nt8 = _round_up(nt, 8)
    per_row = 6 * v * 4 + 2 * 4
    rows = int(vmem_limit * 0.6) // per_row
    rows = max(8, (rows // 8) * 8)
    rows = min(rows, 2048)
    return min(rows, nt8)


# ---------------------------------------------------------------------------
# Kernel 1: contrastive (CLIP) loss, world_size == 1 path.
# Grid over row blocks of the N x N logit matrix. f32 row blocks pipeline;
# the pre-cast, pre-transposed (D, N) feature matrices stay VMEM-resident.
# Each grid step writes a lane-dense per-block partial sum ("parallel" grid).
# ---------------------------------------------------------------------------
def _clip_loss_kernel(img_row_ref, txt_row_ref, txt_allT_ref, img_allT_ref,
                      scale_ref, out_ref, *, n_total, n_pad, tile_n, mxu_dtype):
    i = pl.program_id(0)
    scale = scale_ref[0]

    img_row = img_row_ref[...].astype(jnp.float32)     # (tile_n, D) f32
    txt_row = txt_row_ref[...].astype(jnp.float32)     # (tile_n, D) f32

    # Fold logit_scale into the small row blocks: O(tile*D), not O(tile*N).
    img_row_s = img_row * scale
    txt_row_s = txt_row * scale

    # Diagonal logits directly from the (exact f32) features.
    # NOTE: in the bf16-MXU path, (lse - diag) can be slightly negative per
    # row because the logsumexp uses bf16-operand logits; harmless in the sum.
    diag = jnp.sum(img_row_s * txt_row, axis=1, keepdims=True)   # (tile_n, 1)

    # Canonical (tile_n, D) @ (D, N) MXU matmuls against the pre-cast,
    # pre-transposed residents; all softmax reductions stay lane-axis.
    logits_i2t = jnp.dot(img_row_s.astype(mxu_dtype), txt_allT_ref[...],
                         preferred_element_type=jnp.float32)     # (tile_n, n_pad)
    logits_t2i = jnp.dot(txt_row_s.astype(mxu_dtype), img_allT_ref[...],
                         preferred_element_type=jnp.float32)     # (tile_n, n_pad)

    if n_pad > n_total:  # static: masking only emitted when padding exists
        neg = jnp.float32(-1e30)
        col_ids = lax.broadcasted_iota(jnp.int32, (1, n_pad), 1)
        col_mask = col_ids < n_total
        logits_i2t = jnp.where(col_mask, logits_i2t, neg)
        logits_t2i = jnp.where(col_mask, logits_t2i, neg)
        row_ids = i * tile_n + lax.broadcasted_iota(jnp.int32, (tile_n, 1), 0)
        row_valid = (row_ids < n_total).astype(jnp.float32)
    else:
        row_valid = None

    def _ce_sum(row_logits):
        m = jnp.max(row_logits, axis=1, keepdims=True)
        lse = m + jnp.log(jnp.sum(jnp.exp(row_logits - m), axis=1, keepdims=True))
        per_row = lse - diag
        if row_valid is not None:
            per_row = per_row * row_valid
        return jnp.sum(per_row)

    partial = _ce_sum(logits_i2t) + _ce_sum(logits_t2i)
    out_ref[...] = jnp.full((1, 8, 128), partial, dtype=jnp.float32)


def clip_loss(image_features, text_features, logit_scale, *,
              clip_loss_weight=1.0, mxu_dtype=jnp.bfloat16, tile_n=None,
              vmem_limit=None):
    n, d = image_features.shape
    if vmem_limit is None:
        vmem_limit = _default_vmem_limit()
    mxu_itemsize = jnp.dtype(mxu_dtype).itemsize
    if tile_n is None:
        tile_n = _clip_tile_n(n, d, mxu_itemsize, vmem_limit)
    n_pad = _round_up(n, tile_n)
    num_blocks = n_pad // tile_n

    img_f32 = image_features.astype(jnp.float32)
    txt_f32 = text_features.astype(jnp.float32)
    if n_pad != n:
        pad = ((0, n_pad - n), (0, 0))
        img_f32 = jnp.pad(img_f32, pad)
        txt_f32 = jnp.pad(txt_f32, pad)

    # Pre-cast + pre-transpose the resident matmul operands in the wrapper:
    # halves their HBM/VMEM footprint in bf16 and gives the canonical (D, N)
    # MXU weight layout (lane-dense N, no in-kernel transpose / per-step cast).
    txt_allT = jnp.transpose(txt_f32).astype(mxu_dtype)   # (D, n_pad)
    img_allT = jnp.transpose(img_f32).astype(mxu_dtype)   # (D, n_pad)

    scale_arr = jnp.reshape(logit_scale, (1,)).astype(jnp.float32)

    kernel = functools.partial(_clip_loss_kernel, n_total=n, n_pad=n_pad,
                               tile_n=tile_n, mxu_dtype=mxu_dtype)
    partials = pl.pallas_call(
        kernel,
        out_shape=jax.ShapeDtypeStruct((num_blocks, 8, 128), jnp.float32),
        grid=(num_blocks,),
        in_specs=[
            pl.BlockSpec((tile_n, d), lambda i: (i, 0)),   # image rows (pipelined, f32)
            pl.BlockSpec((tile_n, d), lambda i: (i, 0)),   # text rows  (pipelined, f32)
            pl.BlockSpec(memory_space=pltpu.VMEM),         # text^T  resident (mxu_dtype)
            pl.BlockSpec(memory_space=pltpu.VMEM),         # image^T resident (mxu_dtype)
            pl.BlockSpec(memory_space=pltpu.SMEM),         # logit_scale scalar
        ],
        out_specs=pl.BlockSpec((1, 8, 128), lambda i: (i, 0, 0)),
        compiler_params=pltpu.CompilerParams(
            dimension_semantics=("parallel",),
            vmem_limit_bytes=int(vmem_limit)),
    )(img_f32, txt_f32, txt_allT, img_allT, scale_arr)

    return jnp.float32(clip_loss_weight * 0.5 / n) * jnp.sum(partials[:, 0, 0])


# ---------------------------------------------------------------------------
# Kernel 2: caption cross-entropy with ignore_index=pad_id.
# Grid over token-row tiles of the flattened (B*T, V) logits; per-block
# partial loss-sum and valid-count are written lane-dense ("parallel" grid)
# and reduced in the wrapper.
# ---------------------------------------------------------------------------
def _caption_loss_kernel(logits_ref, labels_ref, loss_ref, cnt_ref, *, pad_id):
    logits = logits_ref[...].astype(jnp.float32)   # (tile_nt, V)
    labels = labels_ref[...]                       # (tile_nt, 1) int32
    tile_nt, v = logits.shape

    col_ids = lax.broadcasted_iota(jnp.int32, (tile_nt, v), 1)
    onehot = col_ids == labels

    # One pass over the tile: shift by the row max, derive both the picked
    # (label) logit and the logsumexp from the same shifted values.
    m = jnp.max(logits, axis=1, keepdims=True)
    shifted = logits - m
    picked = jnp.sum(jnp.where(onehot, shifted, 0.0), axis=1, keepdims=True)
    lse = jnp.log(jnp.sum(jnp.exp(shifted), axis=1, keepdims=True))
    per_tok = lse - picked                         # == full_lse - picked_logit

    valid = (labels != pad_id).astype(jnp.float32)  # pad rows (incl. padding) -> 0
    loss_ref[...] = jnp.full((1, 8, 128), jnp.sum(valid * per_tok), dtype=jnp.float32)
    cnt_ref[...] = jnp.full((1, 8, 128), jnp.sum(valid), dtype=jnp.float32)


def caption_loss(logits, labels, *, pad_id=0, caption_loss_weight=1.0,
                 tile_nt=None, vmem_limit=None):
    b, t, v = logits.shape
    nt = b * t
    if vmem_limit is None:
        vmem_limit = _default_vmem_limit()
    if tile_nt is None:
        tile_nt = _caption_tile_rows(nt, v, vmem_limit)
    nt_pad = _round_up(nt, tile_nt)
    num_blocks = nt_pad // tile_nt

    logits2d = logits.reshape(nt, v).astype(jnp.float32)
    labels2d = labels.reshape(nt, 1).astype(jnp.int32)
    if nt_pad != nt:
        logits2d = jnp.pad(logits2d, ((0, nt_pad - nt), (0, 0)))
        labels2d = jnp.pad(labels2d, ((0, nt_pad - nt), (0, 0)),
                           constant_values=pad_id)

    kernel = functools.partial(_caption_loss_kernel, pad_id=int(pad_id))
    loss_p, cnt_p = pl.pallas_call(
        kernel,
        out_shape=(jax.ShapeDtypeStruct((num_blocks, 8, 128), jnp.float32),
                   jax.ShapeDtypeStruct((num_blocks, 8, 128), jnp.float32)),
        grid=(num_blocks,),
        in_specs=[
            pl.BlockSpec((tile_nt, v), lambda i: (i, 0)),
            pl.BlockSpec((tile_nt, 1), lambda i: (i, 0)),
        ],
        out_specs=(pl.BlockSpec((1, 8, 128), lambda i: (i, 0, 0)),
                   pl.BlockSpec((1, 8, 128), lambda i: (i, 0, 0))),
        compiler_params=pltpu.CompilerParams(
            dimension_semantics=("parallel",),
            vmem_limit_bytes=int(vmem_limit)),
    )(logits2d, labels2d)

    # NOTE: all-pad batch -> 0/0 -> NaN, same as F.cross_entropy(ignore_index=...)
    # when every target is ignored.
    return (jnp.float32(caption_loss_weight)
            * jnp.sum(loss_p[:, 0, 0]) / jnp.sum(cnt_p[:, 0, 0]))


# ---------------------------------------------------------------------------
# CoCaLoss wrapper (world_size == 1 semantics).
# ---------------------------------------------------------------------------
def coca_loss(image_features, text_features, logits, labels, logit_scale,
              caption_loss_weight=1.0, clip_loss_weight=1.0, pad_id=0,
              mxu_dtype=jnp.bfloat16):
    clip = clip_loss(image_features, text_features, logit_scale,
                     clip_loss_weight=clip_loss_weight, mxu_dtype=mxu_dtype)
    cap = caption_loss(logits, labels, pad_id=pad_id,
                       caption_loss_weight=caption_loss_weight)
    return clip, cap


if __name__ == "__main__":
    key = jax.random.PRNGKey(0)
    k1, k2, k3, k4 = jax.random.split(key, 4)

    # N deliberately not a multiple of 8 and B*T not a multiple of 8 so the
    # pad-to-tile + masking paths are exercised.
    N, D = 12, 32         # contrastive batch / embedding dim
    B, T, V = 2, 7, 128   # caption batch / seq len / vocab
    PAD_ID = 0

    image_features = jax.random.normal(k1, (N, D), dtype=jnp.float32)
    text_features = jax.random.normal(k2, (N, D), dtype=jnp.float32)
    cap_logits = jax.random.normal(k3, (B, T, V), dtype=jnp.float32)
    cap_labels = jax.random.randint(k4, (B, T), 0, V, dtype=jnp.int32)
    cap_labels = cap_labels.at[0, 0].set(PAD_ID).at[1, T - 1].set(PAD_ID)

    logit_scale = jnp.float32(10.0)
    caption_loss_weight = 2.0
    clip_loss_weight = 1.0

    # fp32-MXU path (comparable to the exact fp32 reference).
    clip_l, cap_l = coca_loss(
        image_features, text_features, cap_logits, cap_labels, logit_scale,
        caption_loss_weight=caption_loss_weight,
        clip_loss_weight=clip_loss_weight,
        pad_id=PAD_ID,
        mxu_dtype=jnp.float32,
    )
    jax.block_until_ready((clip_l, cap_l))
    assert jnp.isfinite(clip_l) and jnp.isfinite(cap_l)

    # Pure-JAX reference (exact f32 matmul).
    def ref_coca():
        lg = logit_scale * jnp.dot(image_features, text_features.T,
                                   precision=lax.Precision.HIGHEST)
        lbl = jnp.arange(N)

        def ce(x):
            return jnp.mean(jax.nn.logsumexp(x, axis=1) - x[jnp.arange(N), lbl])

        clip_ref = clip_loss_weight * 0.5 * (ce(lg) + ce(lg.T))
        fl = cap_logits.reshape(B * T, V)
        fy = cap_labels.reshape(B * T)
        per_tok = jax.nn.logsumexp(fl, axis=1) - fl[jnp.arange(B * T), fy]
        m = (fy != PAD_ID).astype(jnp.float32)
        cap_ref = caption_loss_weight * jnp.sum(per_tok * m) / jnp.sum(m)
        return clip_ref, cap_ref

    clip_ref, cap_ref = ref_coca()
    assert jnp.allclose(clip_l, clip_ref, atol=1e-3, rtol=1e-3), (clip_l, clip_ref)
    assert jnp.allclose(cap_l, cap_ref, atol=1e-4, rtol=1e-4), (cap_l, cap_ref)

    # bf16-MXU default path (v6e/v7x fast path): looser tolerance on the clip
    # term (bf16 similarity matmul); caption term is mxu_dtype-independent.
    clip_bf16, cap_bf16 = coca_loss(
        image_features, text_features, cap_logits, cap_labels, logit_scale,
        caption_loss_weight=caption_loss_weight,
        clip_loss_weight=clip_loss_weight,
        pad_id=PAD_ID,
    )
    jax.block_until_ready((clip_bf16, cap_bf16))
    assert jnp.isfinite(clip_bf16) and jnp.isfinite(cap_bf16)
    assert jnp.allclose(clip_bf16, clip_ref, atol=0.5, rtol=0.1), (clip_bf16, clip_ref)
    assert jnp.allclose(cap_bf16, cap_ref, atol=1e-4, rtol=1e-4), (cap_bf16, cap_ref)

    print("KERNEL_OK")
</pallas_src>

<mosaic_0001>
module attributes {stable_mosaic.version = 11 : i64} {
  func.func @_clip_loss_kernel(%arg0: i32, %arg1: memref<16x32xf32, #tpu.memory_space<vmem>>, %arg2: memref<16x32xf32, #tpu.memory_space<vmem>>, %arg3: memref<32x16xf32, #tpu.memory_space<vmem>>, %arg4: memref<32x16xf32, #tpu.memory_space<vmem>>, %arg5: memref<1xf32, #tpu.memory_space<smem>>, %arg6: memref<1x8x128xf32, #tpu.memory_space<vmem>>) attributes {dimension_semantics = [#tpu.dimension_semantics<parallel>], iteration_bounds = array<i64: 1>, scalar_prefetch = 0 : i64, scratch_operands = 0 : i64, tpu.core_type = #tpu.core_type<tc>, window_params = [{transform_indices = @transform_0, window_bounds = array<i64: 16, 32>}, {transform_indices = @transform_1, window_bounds = array<i64: 16, 32>}, {pipeline_mode = #tpu.pipeline_mode<synchronous>, transform_indices = @transform_2, window_bounds = array<i64: 32, 16>}, {pipeline_mode = #tpu.pipeline_mode<synchronous>, transform_indices = @transform_3, window_bounds = array<i64: 32, 16>}, {transform_indices = @transform_4, window_bounds = array<i64: 1>}, {transform_indices = @transform_5, window_bounds = array<i64: 1, 8, 128>}]} {
    %c0 = arith.constant 0 : index
    %0 = memref.load %arg5[%c0] : memref<1xf32, #tpu.memory_space<smem>>
    %c0_0 = arith.constant 0 : index
    %c0_1 = arith.constant 0 : index
    %1 = vector.load %arg1[%c0_0, %c0_1] : memref<16x32xf32, #tpu.memory_space<vmem>>, vector<16x32xf32>
    %c0_2 = arith.constant 0 : index
    %c0_3 = arith.constant 0 : index
    %2 = vector.load %arg2[%c0_2, %c0_3] : memref<16x32xf32, #tpu.memory_space<vmem>>, vector<16x32xf32>
    %3 = vector.broadcast %0 : f32 to vector<16x32xf32>
    %4 = arith.mulf %1, %3 : vector<16x32xf32>
    %5 = vector.broadcast %0 : f32 to vector<16x32xf32>
    %6 = arith.mulf %2, %5 : vector<16x32xf32>
    %7 = arith.mulf %4, %2 : vector<16x32xf32>
    %cst = arith.constant dense<0.000000e+00> : vector<16xf32>
    %8 = vector.multi_reduction <add>, %7, %cst [1] : vector<16x32xf32> to vector<16xf32>
    %9 = vector.shape_cast %8 : vector<16xf32> to vector<16x1xf32>
    %c0_4 = arith.constant 0 : index
    %c0_5 = arith.constant 0 : index
    %10 = vector.load %arg3[%c0_4, %c0_5] : memref<32x16xf32, #tpu.memory_space<vmem>>, vector<32x16xf32>
    %cst_6 = arith.constant dense<0.000000e+00> : vector<16x16xf32>
    %11 = tpu.matmul %4, %10, %cst_6 {dimension_numbers = #tpu.dot_dimension_numbers<[1], [0], [0], [1], [0, 0, 1, 1], [], []>} : vector<16x32xf32>, vector<32x16xf32>, vector<16x16xf32> -> vector<16x16xf32>
    %c0_7 = arith.constant 0 : index
    %c0_8 = arith.constant 0 : index
    %12 = vector.load %arg4[%c0_7, %c0_8] : memref<32x16xf32, #tpu.memory_space<vmem>>, vector<32x16xf32>
    %cst_9 = arith.constant dense<0.000000e+00> : vector<16x16xf32>
    %13 = tpu.matmul %6, %12, %cst_9 {dimension_numbers = #tpu.dot_dimension_numbers<[1], [0], [0], [1], [0, 0, 1, 1], [], []>} : vector<16x32xf32>, vector<32x16xf32>, vector<16x16xf32> -> vector<16x16xf32>
    %14 = tpu.iota {dimensions = array<i32: 1>} : vector<1x16xi32>
    %c12_i32 = arith.constant 12 : i32
    %15 = vector.broadcast %c12_i32 : i32 to vector<1x16xi32>
    %16 = arith.cmpi slt, %14, %15 : vector<1x16xi32>
    %cst_10 = arith.constant -1.000000e+30 : f32
    %17 = vector.shape_cast %16 : vector<1x16xi1> to vector<1x16xi1>
    %18 = vector.broadcast %17 : vector<1x16xi1> to vector<16x16xi1>
    %19 = vector.broadcast %cst_10 : f32 to vector<16x16xf32>
    %20 = arith.select %18, %11, %19 : vector<16x16xi1>, vector<16x16xf32>
    %cst_11 = arith.constant -1.000000e+30 : f32
    %21 = vector.shape_cast %16 : vector<1x16xi1> to vector<1x16xi1>
    %22 = vector.broadcast %21 : vector<1x16xi1> to vector<16x16xi1>
    %23 = vector.broadcast %cst_11 : f32 to vector<16x16xf32>
    %24 = arith.select %22, %13, %23 : vector<16x16xi1>, vector<16x16xf32>
    %c16_i32 = arith.constant 16 : i32
    %25 = arith.muli %arg0, %c16_i32 : i32
    %26 = tpu.iota {dimensions = array<i32: 0>} : vector<16x1xi32>
    %27 = vector.broadcast %25 : i32 to vector<16x1xi32>
    %28 = arith.addi %27, %26 : vector<16x1xi32>
    %c12_i32_12 = arith.constant 12 : i32
    %29 = vector.broadcast %c12_i32_12 : i32 to vector<16x1xi32>
    %30 = arith.cmpi slt, %28, %29 : vector<16x1xi32>
    %31 = arith.extui %30 : vector<16x1xi1> to vector<16x1xi32>
    %32 = arith.sitofp %31 : vector<16x1xi32> to vector<16x1xf32>
    %cst_13 = arith.constant dense<0xFF800000> : vector<16xf32>
    %33 = vector.multi_reduction <maximumf>, %20, %cst_13 [1] : vector<16x16xf32> to vector<16xf32>
    %34 = vector.shape_cast %33 : vector<16xf32> to vector<16x1xf32>
    %35 = vector.broadcast %34 : vector<16x1xf32> to vector<16x16xf32>
    %36 = arith.subf %20, %35 : vector<16x16xf32>
    %37 = math.exp %36 : vector<16x16xf32>
    %cst_14 = arith.constant dense<0.000000e+00> : vector<16xf32>
    %38 = vector.multi_reduction <add>, %37, %cst_14 [1] : vector<16x16xf32> to vector<16xf32>
    %39 = vector.shape_cast %38 : vector<16xf32> to vector<16x1xf32>
    %40 = math.log %39 : vector<16x1xf32>
    %41 = arith.addf %34, %40 : vector<16x1xf32>
    %42 = arith.subf %41, %9 : vector<16x1xf32>
    %43 = arith.mulf %42, %32 : vector<16x1xf32>
    %44 = vector.shape_cast %43 : vector<16x1xf32> to vector<1x16x1xf32>
    %cst_15 = arith.constant dense<0.000000e+00> : vector<1xf32>
    %45 = vector.multi_reduction <add>, %44, %cst_15 [1, 2] : vector<1x16x1xf32> to vector<1xf32>
    %46 = vector.shape_cast %45 : vector<1xf32> to vector<1x1x1xf32>
    %47 = vector.extract %46[0, 0, 0] : f32 from vector<1x1x1xf32>
    %cst_16 = arith.constant dense<0xFF800000> : vector<16xf32>
    %48 = vector.multi_reduction <maximumf>, %24, %cst_16 [1] : vector<16x16xf32> to vector<16xf32>
    %49 = vector.shape_cast %48 : vector<16xf32> to vector<16x1xf32>
    %50 = vector.broadcast %49 : vector<16x1xf32> to vector<16x16xf32>
    %51 = arith.subf %24, %50 : vector<16x16xf32>
    %52 = math.exp %51 : vector<16x16xf32>
    %cst_17 = arith.constant dense<0.000000e+00> : vector<16xf32>
    %53 = vector.multi_reduction <add>, %52, %cst_17 [1] : vector<16x16xf32> to vector<16xf32>
    %54 = vector.shape_cast %53 : vector<16xf32> to vector<16x1xf32>
    %55 = math.log %54 : vector<16x1xf32>
    %56 = arith.addf %49, %55 : vector<16x1xf32>
    %57 = arith.subf %56, %9 : vector<16x1xf32>
    %58 = arith.mulf %57, %32 : vector<16x1xf32>
    %59 = vector.shape_cast %58 : vector<16x1xf32> to vector<1x16x1xf32>
    %cst_18 = arith.constant dense<0.000000e+00> : vector<1xf32>
    %60 = vector.multi_reduction <add>, %59, %cst_18 [1, 2] : vector<1x16x1xf32> to vector<1xf32>
    %61 = vector.shape_cast %60 : vector<1xf32> to vector<1x1x1xf32>
    %62 = vector.extract %61[0, 0, 0] : f32 from vector<1x1x1xf32>
    %63 = arith.addf %47, %62 : f32
    %64 = vector.broadcast %63 : f32 to vector<1x8x128xf32>
    %c0_19 = arith.constant 0 : index
    %c0_20 = arith.constant 0 : index
    %c0_21 = arith.constant 0 : index
    %65 = vector.load %arg6[%c0_19, %c0_20, %c0_21] : memref<1x8x128xf32, #tpu.memory_space<vmem>>, vector<1x8x128xf32>
    tpu.vector_store %arg6[%c0_19, %c0_20, %c0_21], %64 {strides = array<i32>} : memref<1x8x128xf32, #tpu.memory_space<vmem>>, vector<1x8x128xf32>,
    return
  }
  func.func @transform_0(%arg0: i32) -> (i32, i32) {
    %c0_i32 = arith.constant 0 : i32
    %c0_i32_0 = arith.constant 0 : i32
    return %arg0, %c0_i32 : i32, i32
  }
  func.func @transform_1(%arg0: i32) -> (i32, i32) {
    %c0_i32 = arith.constant 0 : i32
    %c0_i32_0 = arith.constant 0 : i32
    return %arg0, %c0_i32 : i32, i32
  }
  func.func @transform_2(%arg0: i32) -> (i32, i32) {
    %c0_i32 = arith.constant 0 : i32
    %c0_i32_0 = arith.constant 0 : i32
    %c0_i32_1 = arith.constant 0 : i32
    return %c0_i32, %c0_i32_0 : i32, i32
  }
  func.func @transform_3(%arg0: i32) -> (i32, i32) {
    %c0_i32 = arith.constant 0 : i32
    %c0_i32_0 = arith.constant 0 : i32
    %c0_i32_1 = arith.constant 0 : i32
    return %c0_i32, %c0_i32_0 : i32, i32
  }
  func.func @transform_4(%arg0: i32) -> i32 {
    %c0_i32 = arith.constant 0 : i32
    %c0_i32_0 = arith.constant 0 : i32
    return %c0_i32 : i32
  }
  func.func @transform_5(%arg0: i32) -> (i32, i32, i32) {
    %c0_i32 = arith.constant 0 : i32
    %c0_i32_0 = arith.constant 0 : i32
    %c0_i32_1 = arith.constant 0 : i32
    return %arg0, %c0_i32, %c0_i32_0 : i32, i32, i32
  }
}

</mosaic_0001>

<llo_original>
// kernel: tpu_custom_call.1
$region0: #{tpu_custom_call.1}
  #allocation0 [shape = 'u32[]', space=smem, size = 0x4, offset = 0x4, fixed_abs, tag = 'smem constant byte address 0x4 - core index']
  #allocation1 [shape = 'u32[144,128]{1,0:T(1,128)}', space=vmem, size = 0x12000, scoped, tag = 'internal scratch']
  #allocation2 [shape = 'f32[1]{0:T(128)S(6)}', space=smem, size = 0x200, scoped, tag = 'scoped memory for tpu_custom_call.1']
  %s0 = inlined_call_operand.vmem [shape: f32[16,32], index: 0, kind: input, shape index: {}]
  %s1 = inlined_call_operand.vmem [shape: f32[16,32], index: 1, kind: input, shape index: {}]
  %s2 = inlined_call_operand.vmem [shape: f32[32,16], index: 2, kind: input, shape index: {}]
  %s3 = inlined_call_operand.vmem [shape: f32[32,16], index: 3, kind: input, shape index: {}]
  %s4 = inlined_call_operand.<no memory space> [shape: f32[1], index: 4, kind: input, shape index: {}]
  %s5 = inlined_call_operand.hbm [shape: f32[1,8,128], index: 5, kind: output, shape index: {}]
  %s6 = sld [smem:[#allocation0]]
  $region30: #{tpu_custom_call.1} parent=0
    _
  %s8 = ssub.s32 1, %s6
  %s9 = scalar_select 0, %s8, %s6
  %10 = sst [smem:[#allocation2]] %s4
  $region1: #{tpu_custom_call.1} parent=0
    #allocation3 [shape = 'u8[4096]{0}', space=vmem, size = 0x1000, scoped, tag = 'output window, operand 0, single buffered']
    #allocation4 [shape = 's32[1]{0}', space=sflag, size = 0x4, scoped, tag = 'scoped memory for tpu_custom_call.1']
    %11 = vsyncpa [#allocation4], 0
    // Predicated region
    $region2: #{tpu_custom_call.1} parent=1 // pred_check
      _
    $region3: #{tpu_custom_call.1} parent=1 // pred_check_branch
      %13 = sbr.rel (0) target = $region5
    $region4: #{tpu_custom_call.1} parent=1 // pred_region
      _
    $region5: #{tpu_custom_call.1} parent=1 // pred_fallthru
      _
    // Predicated region
    $region6: #{tpu_custom_call.1} parent=1 // pred_check
      _
    $region7: #{tpu_custom_call.1} parent=1 // pred_check_branch
      %15 = sbr.rel (0) target = $region9
    $region8: #{tpu_custom_call.1} parent=1 // pred_region
      _
    $region9: #{tpu_custom_call.1} parent=1 // pred_fallthru
      _
    // Predicated region
    $region10: #{tpu_custom_call.1} parent=1 // pred_check
      _
    $region11: #{tpu_custom_call.1} parent=1 // pred_check_branch
      %17 = sbr.rel (0) target = $region13
    $region12: #{tpu_custom_call.1} parent=1 // pred_region
      _
    $region13: #{tpu_custom_call.1} parent=1 // pred_fallthru
      _
    // Predicated region
    $region14: #{tpu_custom_call.1} parent=1 // pred_check
      _
    $region15: #{tpu_custom_call.1} parent=1 // pred_check_branch
      %19 = sbr.rel (0) target = $region17
    $region16: #{tpu_custom_call.1} parent=1 // pred_region
      _
    $region17: #{tpu_custom_call.1} parent=1 // pred_fallthru
      _
    // Predicated region
    $region18: #{tpu_custom_call.1} parent=1 // pred_check
      _
    $region19: #{tpu_custom_call.1} parent=1 // pred_check_branch
      %21 = sbr.rel (0) target = $region21
    $region20: #{tpu_custom_call.1} parent=1 // pred_region
      _
    $region21: #{tpu_custom_call.1} parent=1 // pred_fallthru
      _
    %s22 = sld [smem:[#allocation2]]
    %v23 = vld [vmem:[%s0] sm:$0xff]
    %v24 = vld [vmem:[%s0 + $0x8] sm:$0xff]
    %v25 = vld [vmem:[%s1] sm:$0xff]
    %v26 = vld [vmem:[%s1 + $0x8] sm:$0xff]
    %v27 = vstv %s22
    %v28 = vmul.f32 %v23, %v27
    %v29 = vmul.f32 %v24, %v27
    %v30 = vmul.f32 %v25, %v27
    %v31 = vmul.f32 %v26, %v27
    %v32 = vmul.f32 %v28, %v25
    %v33 = vmul.f32 %v29, %v26
    %vm34 = vcmask 261120
    %v35 = vsel %vm34, %v32, 0.0
    %36 = vadd.xlane.f32.xlu0 %v35
    %v37 = vpop.xlane.xlu0 %36
    %v38 = vsel %vm34, %v33, 0.0
    %39 = vadd.xlane.f32.xlu0 %v38
    %v40 = vpop.xlane.xlu0 %39
    %v41 = vld [vmem:[%s2] sm:$0xff]
    %v42 = vld [vmem:[%s2 + $0x8] sm:$0xff]
    %v43 = vld [vmem:[%s2 + $0x10] sm:$0xff]
    %v44 = vld [vmem:[%s2 + $0x18] sm:$0xff]
    %v46 = vsel %vm34, %v28, 0
    %v49 = vsel %vm34, %v29, 0
    %51 = vmatprep.subr.mxu0 0.0
    %52 = vmatpush1.msra.mxu0 %v41
    %53 = vmatprep.subr.mxu0 0.0
    %54 = vmatpush1.msra.mxu0 %v42
    %55 = vmatprep.subr.mxu0 0.0
    %56 = vmatpush1.msra.mxu0 %v43
    %57 = vmatprep.subr.mxu0 0.0
    %58 = vmatpush1.msra.mxu0 %v44
    %59 = vmatprep.subr.mxu0 0.0
    %60 = vmatpush1.msra.mxu0 0.0
    %61 = vmatprep.subr.mxu0 0.0
    %62 = vmatpush1.msra.mxu0 0.0
    %63 = vmatprep.subr.mxu0 0.0
    %64 = vmatpush1.msra.mxu0 0.0
    %65 = vmatprep.subr.mxu0 0.0
    %66 = vmatpush1.msra.mxu0 0.0
    %67 = vmatprep.subr.mxu0 0.0
    %68 = vmatpush1.msra.mxu0 0.0
    %69 = vmatprep.subr.mxu0 0.0
    %70 = vmatpush1.msra.mxu0 0.0
    %71 = vmatprep.subr.mxu0 0.0
    %72 = vmatpush1.msra.mxu0 0.0
    %73 = vmatprep.subr.mxu0 0.0
    %74 = vmatpush1.msra.mxu0 0.0
    %75 = vmatprep.subr.mxu0 0.0
    %76 = vmatpush1.msra.mxu0 0.0
    %77 = vmatprep.subr.mxu0 0.0
    %78 = vmatpush1.msra.mxu0 0.0
    %79 = vmatprep.subr.mxu0 0.0
    %80 = vmatpush1.msra.mxu0 0.0
    %81 = vmatprep.subr.mxu0 0.0
    %82 = vmatpush1.msra.mxu0 0.0
    %83 = vmatprep.subr.mxu0 0.0
    %84 = vmatpush1.msra.mxu0 0.0
    %85 = vmatprep.subr.mxu0 0.0
    %86 = vmatpush1.msra.mxu0 0.0
    %87 = vmatprep.subr.mxu0 0.0
    %88 = vmatpush1.msra.mxu0 0.0
    %89 = vmatprep.subr.mxu0 0.0
    %90 = vmatpush1.msra.mxu0 0.0
    %91 = vmatprep.subr.mxu0 0.0
    %92 = vmatpush1.msra.mxu0 0.0
    %93 = vmatprep.subr.mxu0 0.0
    %94 = vmatpush1.msra.mxu0 0.0
    %95 = vmatprep.subr.mxu0 0.0
    %96 = vmatpush1.msra.mxu0 0.0
    %97 = vmatprep.subr.mxu0 0.0
    %98 = vmatpush1.msra.mxu0 0.0
    %99 = vmatprep.subr.mxu0 0.0
    %100 = vmatpush1.msra.mxu0 0.0
    %101 = vmatprep.subr.mxu0 0.0
    %102 = vmatpush1.msra.mxu0 0.0
    %103 = vmatprep.subr.mxu0 0.0
    %104 = vmatpush1.msra.mxu0 0.0
    %105 = vmatprep.subr.mxu0 0.0
    %106 = vmatpush1.msra.mxu0 0.0
    %107 = vmatprep.subr.mxu0 0.0
    %108 = vmatpush1.msra.mxu0 0.0
    %109 = vmatprep.subr.mxu0 0.0
    %110 = vmatpush1.msra.mxu0 0.0
    %111 = vmatprep.subr.mxu0 0.0
    %112 = vmatpush1.msra.mxu0 0.0
    %113 = vmatprep.subr.mxu0 0.0
    %114 = vmatpush1.msra.mxu0 0.0
    %115 = vmatprep.mubr.f32.mxu0 0.0
    %116 = vmatmul.mubr.f32.gmra.mrb[0].mxu0 %v46
    %v117 = vpop.f32.mrb[0].mxu0
    %v118 = vadd.f32 0.0, %v117
    %v119 = vpop.f32.mrb[0].mxu0
    %120 = vmatprep.mubr.f32.mxu0 0.0
    %121 = vmatmul.mubr.f32.gmra.mrb[0].mxu0 %v49
    %v122 = vpop.f32.mrb[0].mxu0
    %v123 = vadd.f32 0.0, %v122
    %v124 = vpop.f32.mrb[0].mxu0
    %125 = vdwg.mxu0
    %v126 = vld [vmem:[%s3] sm:$0xff]
    %v127 = vld [vmem:[%s3 + $0x8] sm:$0xff]
    %v128 = vld [vmem:[%s3 + $0x10] sm:$0xff]
    %v129 = vld [vmem:[%s3 + $0x18] sm:$0xff]
    %v131 = vsel %vm34, %v30, 0
    %v134 = vsel %vm34, %v31, 0
    %136 = vmatprep.subr.mxu0 0.0
    %137 = vmatpush1.msra.mxu0 %v126
    %138 = vmatprep.subr.mxu0 0.0
    %139 = vmatpush1.msra.mxu0 %v127
    %140 = vmatprep.subr.mxu0 0.0
    %141 = vmatpush1.msra.mxu0 %v128
    %142 = vmatprep.subr.mxu0 0.0
    %143 = vmatpush1.msra.mxu0 %v129
    %144 = vmatprep.subr.mxu0 0.0
    %145 = vmatpush1.msra.mxu0 0.0
    %146 = vmatprep.subr.mxu0 0.0
    %147 = vmatpush1.msra.mxu0 0.0
    %148 = vmatprep.subr.mxu0 0.0
    %149 = vmatpush1.msra.mxu0 0.0
    %150 = vmatprep.subr.mxu0 0.0
    %151 = vmatpush1.msra.mxu0 0.0
    %152 = vmatprep.subr.mxu0 0.0
    %153 = vmatpush1.msra.mxu0 0.0
    %154 = vmatprep.subr.mxu0 0.0
    %155 = vmatpush1.msra.mxu0 0.0
    %156 = vmatprep.subr.mxu0 0.0
    %157 = vmatpush1.msra.mxu0 0.0
    %158 = vmatprep.subr.mxu0 0.0
    %159 = vmatpush1.msra.mxu0 0.0
    %160 = vmatprep.subr.mxu0 0.0
    %161 = vmatpush1.msra.mxu0 0.0
    %162 = vmatprep.subr.mxu0 0.0
    %163 = vmatpush1.msra.mxu0 0.0
    %164 = vmatprep.subr.mxu0 0.0
    %165 = vmatpush1.msra.mxu0 0.0
    %166 = vmatprep.subr.mxu0 0.0
    %167 = vmatpush1.msra.mxu0 0.0
    %168 = vmatprep.subr.mxu0 0.0
    %169 = vmatpush1.msra.mxu0 0.0
    %170 = vmatprep.subr.mxu0 0.0
    %171 = vmatpush1.msra.mxu0 0.0
    %172 = vmatprep.subr.mxu0 0.0
    %173 = vmatpush1.msra.mxu0 0.0
    %174 = vmatprep.subr.mxu0 0.0
    %175 = vmatpush1.msra.mxu0 0.0
    %176 = vmatprep.subr.mxu0 0.0
    %177 = vmatpush1.msra.mxu0 0.0
    %178 = vmatprep.subr.mxu0 0.0
    %179 = vmatpush1.msra.mxu0 0.0
    %180 = vmatprep.subr.mxu0 0.0
    %181 = vmatpush1.msra.mxu0 0.0
    %182 = vmatprep.subr.mxu0 0.0
    %183 = vmatpush1.msra.mxu0 0.0
    %184 = vmatprep.subr.mxu0 0.0
    %185 = vmatpush1.msra.mxu0 0.0
    %186 = vmatprep.subr.mxu0 0.0
    %187 = vmatpush1.msra.mxu0 0.0
    %188 = vmatprep.subr.mxu0 0.0
    %189 = vmatpush1.msra.mxu0 0.0
    %190 = vmatprep.subr.mxu0 0.0
    %191 = vmatpush1.msra.mxu0 0.0
    %192 = vmatprep.subr.mxu0 0.0
    %193 = vmatpush1.msra.mxu0 0.0
    %194 = vmatprep.subr.mxu0 0.0
    %195 = vmatpush1.msra.mxu0 0.0
    %196 = vmatprep.subr.mxu0 0.0
    %197 = vmatpush1.msra.mxu0 0.0
    %198 = vmatprep.subr.mxu0 0.0
    %199 = vmatpush1.msra.mxu0 0.0
    %200 = vmatprep.mubr.f32.mxu0 0.0
    %201 = vmatmul.mubr.f32.gmra.mrb[0].mxu0 %v131
    %v202 = vpop.f32.mrb[0].mxu0
    %v203 = vadd.f32 0.0, %v202
    %v204 = vpop.f32.mrb[0].mxu0
    %205 = vmatprep.mubr.f32.mxu0 0.0
    %206 = vmatmul.mubr.f32.gmra.mrb[0].mxu0 %v134
    %v207 = vpop.f32.mrb[0].mxu0
    %v208 = vadd.f32 0.0, %v207
    %v209 = vpop.f32.mrb[0].mxu0
    %210 = vdwg.mxu0
    %v211 = vlaneseq
    %v212 = vand.u32 %v211, 127
    %vm213 = vcmp.lt.s32.totalorder %v212, 12
    %v214 = vsel %vm213, 1, 0
    %vm215 = vcmp.eq.s32.totalorder %v214, 1
    %v216 = vsel %vm215, %v118, -1e+30
    %v217 = vsel %vm215, %v123, -1e+30
    %v218 = vsel %vm215, %v203, -1e+30
    %v219 = vsel %vm215, %v208, -1e+30
    %s220 = smul.u32 0, 16
    %v221 = vlaneseq
    %v222 = vshrl.u32 %v221, 7
    %v223 = vadd.s32 %v222, 8
    %v224 = vstv %s220
    %v225 = vadd.s32 %v224, %v222
    %v226 = vadd.s32 %v224, %v223
    %vm227 = vcmp.lt.s32.totalorder %v225, 12
    %vm228 = vcmp.lt.s32.totalorder %v226, 12
    %v229 = vsel %vm227, 1, 0
    %v230 = vsel %vm228, 1, 0
    %v231 = vcvt.s32.f32 %v229
    %v232 = vcvt.s32.f32 %v230
    %vm233 = vcmask 130048
    %v234 = vsel %vm233, %v216, -inf
    %235 = vmax.xlane.f32.xlu0 %v234
    %v236 = vpop.xlane.xlu0 %235
    %v237 = vsel %vm233, %v217, -inf
    %238 = vmax.xlane.f32.xlu0 %v237
    %v239 = vpop.xlane.xlu0 %238
    %v240 = vsub.f32 %v216, %v236
    %v241 = vsub.f32 %v217, %v239
    %v242 = vmul.f32 %v240, 1.442695
    %v243 = vpow.pop %v242
    %v244 = vmul.f32 %v241, 1.442695
    %v245 = vpow.pop %v244
    %v246 = vsel %vm233, %v243, 0.0
    %247 = vadd.xlane.f32.xlu0 %v246
    %v248 = vpop.xlane.xlu0 %247
    %v249 = vsel %vm233, %v245, 0.0
    %250 = vadd.xlane.f32.xlu0 %v249
    %v251 = vpop.xlane.xlu0 %250
    %v252 = vlog2.pop %v248
    %v253 = vmul.f32 %v252, 0.6931472
    %v254 = vlog2.pop %v251
    %v255 = vmul.f32 %v254, 0.6931472
    %v256 = vadd.f32 %v236, %v253
    %v257 = vadd.f32 %v239, %v255
    %v258 = vsub.f32 %v256, %v37
    %v259 = vsub.f32 %v257, %v40
    %v260 = vmul.f32 %v258, %v231
    %v261 = vmul.f32 %v259, %v232
    %vm262 = vcmask 7168
    %v263 = vsel %vm262, %v260, 0.0
    %v264 = vsel %vm262, %v261, 0.0
    %v265 = vadd.f32 %v263, %v264
    %266 = vadd.xlane.f32.xlu0 %v265
    %v267 = vpop.xlane.xlu0 %266
    %v268 = vrot.slane %v267, 4
    %v269 = vadd.f32 %v267, %v268
    %v270 = vrot.slane %v269, 2
    %v271 = vadd.f32 %v269, %v270
    %v272 = vrot.slane %v271, 1
    %v273 = vadd.f32 %v271, %v272
    %s274 = vtos %v273
    %v275 = vsel %vm233, %v218, -inf
    %276 = vmax.xlane.f32.xlu0 %v275
    %v277 = vpop.xlane.xlu0 %276
    %v278 = vsel %vm233, %v219, -inf
    %279 = vmax.xlane.f32.xlu0 %v278
    %v280 = vpop.xlane.xlu0 %279
    %v281 = vsub.f32 %v218, %v277
    %v282 = vsub.f32 %v219, %v280
    %v283 = vmul.f32 %v281, 1.442695
    %v284 = vpow.pop %v283
    %v285 = vmul.f32 %v282, 1.442695
    %v286 = vpow.pop %v285
    %v287 = vsel %vm233, %v284, 0.0
    %288 = vadd.xlane.f32.xlu0 %v287
    %v289 = vpop.xlane.xlu0 %288
    %v290 = vsel %vm233, %v286, 0.0
    %291 = vadd.xlane.f32.xlu0 %v290
    %v292 = vpop.xlane.xlu0 %291
    %v293 = vlog2.pop %v289
    %v294 = vmul.f32 %v293, 0.6931472
    %v295 = vlog2.pop %v292
    %v296 = vmul.f32 %v295, 0.6931472
    %v297 = vadd.f32 %v277, %v294
    %v298 = vadd.f32 %v280, %v296
    %v299 = vsub.f32 %v297, %v37
    %v300 = vsub.f32 %v298, %v40
    %v301 = vmul.f32 %v299, %v231
    %v302 = vmul.f32 %v300, %v232
    %v303 = vsel %vm262, %v301, 0.0
    %v304 = vsel %vm262, %v302, 0.0
    %v305 = vadd.f32 %v303, %v304
    %306 = vadd.xlane.f32.xlu0 %v305
    %v307 = vpop.xlane.xlu0 %306
    %v308 = vrot.slane %v307, 4
    %v309 = vadd.f32 %v307, %v308
    %v310 = vrot.slane %v309, 2
    %v311 = vadd.f32 %v309, %v310
    %v312 = vrot.slane %v311, 1
    %v313 = vadd.f32 %v311, %v312
    %s314 = vtos %v313
    %s315 = sadd.f32 %s274, %s314
    %v316 = vstv %s315
    %317 = vst [vmem:[#allocation3] sm:$0xff] %v316
    // Predicated region
    $region22: #{tpu_custom_call.1} parent=1 // pred_check
      _
    $region23: #{tpu_custom_call.1} parent=1 // pred_check_branch
      %319 = sbr.rel (0) target = $region25
    $region24: #{tpu_custom_call.1} parent=1 // pred_region
      %s321 = ssub.s32 128, 128
      %322 = vsyncadd [#allocation4], %s321
      %s324 = sshll.u32 [#allocation3], 4
      %s325 = int_to_ptr.vmem [resolvable:$true] %s324
      %327 = dma.vmem_to_hbm [thread:$0]  %s325, 128, %s5, [#allocation4]
    $region25: #{tpu_custom_call.1} parent=1 // pred_fallthru
      _
    // Predicated region
    $region26: #{tpu_custom_call.1} parent=1 // pred_check
      _
    $region27: #{tpu_custom_call.1} parent=1 // pred_check_branch
      %329 = sbr.rel (0) target = $region29
    $region28: #{tpu_custom_call.1} parent=1 // pred_region
      %330 = dma.done [#allocation4], 128
    $region29: #{tpu_custom_call.1} parent=1 // pred_fallthru
      _
    %331 = vsyncpa [#allocation4], 1

</llo_original>
